<compile_context>
chip_gen: v7x
topology: tpu7x:2x2x1
jax: 0.10.0
libtpu: 0.0.40
codegen_flags: <defaults>
</compile_context>

<pallas_src>
import functools

import jax
import jax.numpy as jnp
from jax.experimental import pallas as pl
from jax.experimental.pallas import tpu as pltpu


# ----------------------------------------------------------------------------
# Parameter setup (mirrors RotaryEmbedding.__init__), deterministic, pure JAX.
# ----------------------------------------------------------------------------
def build_cos_sin_cache(head_size: int,
                        rotary_dim: int,
                        max_position_embeddings: int,
                        base: float,
                        rope_scaling: dict | None = None) -> jnp.ndarray:
    assert rotary_dim == head_size
    exponents = jnp.arange(0, rotary_dim, 2, dtype=jnp.float32) / rotary_dim
    inv_freq = 1.0 / (base ** exponents)
    if rope_scaling is not None:
        scaling_type = rope_scaling.get("rope_type")
        scaling_factor = rope_scaling.get("factor")
        low_freq_factor = rope_scaling.get("low_freq_factor", 1.0)
        high_freq_factor = rope_scaling.get("high_freq_factor", 4.0)
        original_max_pos = rope_scaling.get("original_max_position_embeddings")
        scale = max_position_embeddings / original_max_pos
        if scale > 1.0 and scaling_type == "llama3":
            lam = (high_freq_factor - low_freq_factor) / (base - 1)
            inv_freq_ext = inv_freq / (
                low_freq_factor + lam * (base ** exponents - 1))
            mscale = (scale / scaling_factor) ** (rotary_dim / (rotary_dim - 2))
            inv_freq = inv_freq_ext * mscale
    t = jnp.arange(max_position_embeddings, dtype=jnp.float32)
    freqs = jnp.einsum("i,j->ij", t, inv_freq)        # (max_pos, rotary_dim // 2)
    cache = jnp.concatenate([jnp.cos(freqs), jnp.sin(freqs)], axis=-1)
    return cache                                       # (max_pos, rotary_dim)


# ----------------------------------------------------------------------------
# Pallas kernel: apply rotary embedding to one token-tile of query and key.
#
#   cs_ref  : (T, rotary_dim)  f32   == [cos | sin] gathered per token
#   q/k     : (T, n_heads * head_size)
# ----------------------------------------------------------------------------
def _rope_kernel(cs_ref, q_ref, k_ref, qo_ref, ko_ref, *,
                 head_size: int, use_roll: bool):
    half = head_size // 2

    # Build [cos, cos] and [-sin, sin] once per tile (a few vreg moves,
    # hidden under the q/k DMA).
    cs = cs_ref[...]                                     # (T, head_size) f32
    cos = cs[:, :half]
    sin = cs[:, half:]
    cos_full = jnp.concatenate([cos, cos], axis=-1)      # (T, head_size)
    sin_signed = jnp.concatenate([-sin, sin], axis=-1)   # (T, head_size)

    def rotate(x_ref, o_ref):
        n_heads = x_ref.shape[1] // head_size
        for h in range(n_heads):                          # static unroll
            sl = slice(h * head_size, (h + 1) * head_size)
            x = x_ref[:, sl].astype(jnp.float32)          # (T, head_size)
            if use_roll:
                # [x1, x2] -> [x2, x1] via one XLU lane rotate (lane-dense).
                x_swap = pltpu.roll(x, shift=half, axis=1)
            else:
                # Fallback for head sizes that do not fill a 128-lane vreg.
                x_swap = jnp.concatenate([x[:, half:], x[:, :half]], axis=-1)
            y = x * cos_full + x_swap * sin_signed
            o_ref[:, sl] = y.astype(o_ref.dtype)

    rotate(q_ref, qo_ref)
    rotate(k_ref, ko_ref)


# ----------------------------------------------------------------------------
# Tiling helpers.
# ----------------------------------------------------------------------------
def _round_up(x: int, m: int) -> int:
    return ((x + m - 1) // m) * m


def _vmem_budget_bytes() -> tuple[int, int]:
    """(tile working-set budget, vmem_limit_bytes) derived from the chip."""
    try:
        cap = int(pltpu.get_tpu_info().vmem_capacity_bytes)
    except Exception:
        cap = 64 * 1024 * 1024           # conservative default: v7x (64 MiB)
    budget = max(16 << 20, int(cap * 0.40))   # v7x: ~25 MiB, v5e/v6e: ~51 MiB
    limit = max(32 << 20, int(cap * 0.75))    # v7x: 48 MiB,  v5e/v6e: 96 MiB
    return budget, min(limit, cap - (8 << 20))


def _pick_tile(requested: int, num_tokens: int, qw: int, kw: int,
               rotary_dim: int, budget: int) -> int:
    """Largest token tile (multiple of 16) whose working set fits the budget,
    capped so the grid has >=2 steps for megacore sharding when possible."""
    req = max(16, (requested // 16) * 16)
    # Rough per-token VMEM bytes (double-buffered in/out tiles + f32 temps).
    per_tok = (qw + kw) * 2 * 2 * 2          # q/k in + out, x2 buffers, bf16
    per_tok += rotary_dim * 4 * 2            # cos_sin f32 input, x2 buffers
    per_tok += (qw + kw) * 4 * 3             # f32 upcast + rolled + product temps
    cap = max(16, (budget // per_tok) // 16 * 16)
    tile = min(req, cap)
    # Keep >=2 grid steps so a 2-TensorCore part (v7x) shards the token axis.
    if num_tokens > 16:
        two_step = max(16, _round_up(-(-num_tokens // 2), 16))
        tile = min(tile, two_step)
    tile = min(tile, _round_up(num_tokens, 16))
    return max(16, tile)


# ----------------------------------------------------------------------------
# Wrapper (mirrors RotaryEmbedding.forward).
# ----------------------------------------------------------------------------
def rotary_embedding_forward(positions: jnp.ndarray,
                             query: jnp.ndarray,
                             key: jnp.ndarray,
                             cos_sin_cache: jnp.ndarray,
                             head_size: int,
                             tile_tokens: int = 512):
    num_tokens = positions.shape[0]
    rotary_dim = cos_sin_cache.shape[-1]
    assert rotary_dim == head_size, "only full rotary (rotary_dim == head_size)"

    # Glue: per-position gather (== cos_sin_cache[positions]).  Raw rows only —
    # duplication / sign folding happens inside the kernel.
    # TODO(synk): fuse this gather into the kernel (scalar-prefetched positions
    # + VMEM-resident cache) to remove the (T, rotary_dim) HBM round trip.
    cos_sin = cos_sin_cache[positions].astype(jnp.float32)   # (T, rotary_dim)

    query_shape = query.shape
    key_shape = key.shape
    q2 = query.reshape(num_tokens, -1)
    k2 = key.reshape(num_tokens, -1)
    qw = q2.shape[1]
    kw = k2.shape[1]
    assert qw % head_size == 0 and kw % head_size == 0

    budget, vmem_limit = _vmem_budget_bytes()
    tile = _pick_tile(tile_tokens, num_tokens, qw, kw, rotary_dim, budget)
    grid = (pl.cdiv(num_tokens, tile),)       # ragged last block handled by Pallas
    use_roll = (head_size % 128 == 0)
    kernel = functools.partial(_rope_kernel, head_size=head_size,
                               use_roll=use_roll)

    q_out, k_out = pl.pallas_call(
        kernel,
        out_shape=(
            jax.ShapeDtypeStruct((num_tokens, qw), q2.dtype),
            jax.ShapeDtypeStruct((num_tokens, kw), k2.dtype),
        ),
        grid_spec=pltpu.PrefetchScalarGridSpec(
            num_scalar_prefetch=0,
            grid=grid,
            in_specs=[
                pl.BlockSpec((tile, rotary_dim), lambda i: (i, 0)),  # cos_sin
                pl.BlockSpec((tile, qw), lambda i: (i, 0)),          # query
                pl.BlockSpec((tile, kw), lambda i: (i, 0)),          # key
            ],
            out_specs=[
                pl.BlockSpec((tile, qw), lambda i: (i, 0)),
                pl.BlockSpec((tile, kw), lambda i: (i, 0)),
            ],
        ),
        input_output_aliases={1: 0, 2: 1},     # in-place RoPE on q/k buffers
        compiler_params=pltpu.CompilerParams(
            dimension_semantics=("parallel",),
            vmem_limit_bytes=vmem_limit,
        ),
    )(cos_sin, q2, k2)

    return q_out.reshape(query_shape), k_out.reshape(key_shape)


# ----------------------------------------------------------------------------
# Pure-JAX reference (for correctness check).
# ----------------------------------------------------------------------------
def _ref_apply_rotary(x, cos, sin, head_size):
    shape = x.shape
    n = shape[0]
    half = head_size // 2
    xf = x.reshape(n, -1, head_size).astype(jnp.float32)
    x1, x2 = xf[..., :half], xf[..., half:]
    c = cos[:, None, :]
    s = sin[:, None, :]
    y = jnp.concatenate([x1 * c - x2 * s, x2 * c + x1 * s], axis=-1)
    return y.reshape(shape).astype(x.dtype)


def _ref_forward(positions, query, key, cache, head_size):
    half = cache.shape[-1] // 2
    cs = cache[positions].astype(jnp.float32)
    cos, sin = cs[:, :half], cs[:, half:]
    q = _ref_apply_rotary(query, cos, sin, head_size)
    k = _ref_apply_rotary(key, cos, sin, head_size)
    return q, k


if __name__ == "__main__":
    head_size = 128
    rotary_dim = 128
    max_position_embeddings = 256
    base = 10000.0
    num_tokens = 12            # deliberately NOT a multiple of the tile
    num_q_heads = 4
    num_kv_heads = 2

    cache = build_cos_sin_cache(head_size, rotary_dim,
                                max_position_embeddings, base,
                                rope_scaling=None)

    root = jax.random.PRNGKey(0)
    k_pos, k_q, k_k = jax.random.split(root, 3)
    positions = jax.random.randint(k_pos, (num_tokens,), 0,
                                   max_position_embeddings, dtype=jnp.int32)
    query = jax.random.normal(
        k_q, (num_tokens, num_q_heads * head_size), dtype=jnp.float32
    ).astype(jnp.bfloat16)
    key = jax.random.normal(
        k_k, (num_tokens, num_kv_heads * head_size), dtype=jnp.float32
    ).astype(jnp.bfloat16)

    # Reference first (kernel outputs may alias/donate the q/k HBM buffers).
    q_ref, k_ref = _ref_forward(positions, query, key, cache, head_size)
    q_ref = jax.block_until_ready(q_ref)
    k_ref = jax.block_until_ready(k_ref)

    q_out, k_out = rotary_embedding_forward(positions, query, key, cache,
                                            head_size)
    q_out = jax.block_until_ready(q_out)
    k_out = jax.block_until_ready(k_out)

    assert q_out.shape == query.shape and q_out.dtype == query.dtype
    assert k_out.shape == key.shape and k_out.dtype == key.dtype
    assert jnp.allclose(q_out.astype(jnp.float32), q_ref.astype(jnp.float32),
                        atol=2e-2, rtol=2e-2)
    assert jnp.allclose(k_out.astype(jnp.float32), k_ref.astype(jnp.float32),
                        atol=2e-2, rtol=2e-2)

    print("KERNEL_OK")
</pallas_src>

<mosaic_0001>
module attributes {stable_mosaic.version = 11 : i64} {
  func.func @_rope_kernel(%arg0: i32, %arg1: memref<16x128xf32, #tpu.memory_space<vmem>>, %arg2: memref<16x512xbf16, #tpu.memory_space<vmem>>, %arg3: memref<16x256xbf16, #tpu.memory_space<vmem>>, %arg4: memref<16x512xbf16, #tpu.memory_space<vmem>>, %arg5: memref<16x256xbf16, #tpu.memory_space<vmem>>) attributes {dimension_semantics = [#tpu.dimension_semantics<parallel>], iteration_bounds = array<i64: 1>, scalar_prefetch = 0 : i64, scratch_operands = 0 : i64, tpu.core_type = #tpu.core_type<tc>, window_params = [{transform_indices = @transform_0, window_bounds = array<i64: 16, 128>}, {transform_indices = @transform_1, window_bounds = array<i64: 16, 512>}, {transform_indices = @transform_2, window_bounds = array<i64: 16, 256>}, {transform_indices = @transform_3, window_bounds = array<i64: 16, 512>}, {transform_indices = @transform_4, window_bounds = array<i64: 16, 256>}]} {
    %c0 = arith.constant 0 : index
    %c0_0 = arith.constant 0 : index
    %0 = vector.load %arg1[%c0, %c0_0] : memref<16x128xf32, #tpu.memory_space<vmem>>, vector<16x128xf32>
    %1 = vector.extract_strided_slice %0 {offsets = [0, 0], sizes = [16, 64], strides = [1, 1]} : vector<16x128xf32> to vector<16x64xf32>
    %2 = vector.extract_strided_slice %0 {offsets = [0, 64], sizes = [16, 64], strides = [1, 1]} : vector<16x128xf32> to vector<16x64xf32>
    %3 = tpu.concatenate %1, %1 in 1 : vector<16x64xf32>, vector<16x64xf32> -> vector<16x128xf32>
    %cst = arith.constant 0.000000e+00 : f32
    %4 = vector.broadcast %cst : f32 to vector<16x64xf32>
    %5 = arith.subf %4, %2 : vector<16x64xf32>
    %6 = tpu.concatenate %5, %2 in 1 : vector<16x64xf32>, vector<16x64xf32> -> vector<16x128xf32>
    %c0_1 = arith.constant 0 : index
    %c0_2 = arith.constant 0 : index
    %7 = vector.load %arg2[%c0_1, %c0_2] : memref<16x512xbf16, #tpu.memory_space<vmem>>, vector<16x128xbf16>
    %8 = arith.extf %7 : vector<16x128xbf16> to vector<16x128xf32>
    %c64_i32 = arith.constant 64 : i32
    %9 = tpu.dynamic_rotate %8 by %c64_i32 dim 1 : vector<16x128xf32>, i32 -> vector<16x128xf32>
    %10 = arith.mulf %8, %3 : vector<16x128xf32>
    %11 = arith.mulf %9, %6 : vector<16x128xf32>
    %12 = arith.addf %10, %11 : vector<16x128xf32>
    %13 = arith.truncf %12 : vector<16x128xf32> to vector<16x128xbf16>
    %c0_3 = arith.constant 0 : index
    %c0_4 = arith.constant 0 : index
    %14 = vector.load %arg4[%c0_3, %c0_4] : memref<16x512xbf16, #tpu.memory_space<vmem>>, vector<16x128xbf16>
    tpu.vector_store %arg4[%c0_3, %c0_4], %13 {strides = array<i32>} : memref<16x512xbf16, #tpu.memory_space<vmem>>, vector<16x128xbf16>,
    %c0_5 = arith.constant 0 : index
    %c128 = arith.constant 128 : index
    %15 = vector.load %arg2[%c0_5, %c128] : memref<16x512xbf16, #tpu.memory_space<vmem>>, vector<16x128xbf16>
    %16 = arith.extf %15 : vector<16x128xbf16> to vector<16x128xf32>
    %c64_i32_6 = arith.constant 64 : i32
    %17 = tpu.dynamic_rotate %16 by %c64_i32_6 dim 1 : vector<16x128xf32>, i32 -> vector<16x128xf32>
    %18 = arith.mulf %16, %3 : vector<16x128xf32>
    %19 = arith.mulf %17, %6 : vector<16x128xf32>
    %20 = arith.addf %18, %19 : vector<16x128xf32>
    %21 = arith.truncf %20 : vector<16x128xf32> to vector<16x128xbf16>
    %c0_7 = arith.constant 0 : index
    %c128_8 = arith.constant 128 : index
    %22 = vector.load %arg4[%c0_7, %c128_8] : memref<16x512xbf16, #tpu.memory_space<vmem>>, vector<16x128xbf16>
    tpu.vector_store %arg4[%c0_7, %c128_8], %21 {strides = array<i32>} : memref<16x512xbf16, #tpu.memory_space<vmem>>, vector<16x128xbf16>,
    %c0_9 = arith.constant 0 : index
    %c256 = arith.constant 256 : index
    %23 = vector.load %arg2[%c0_9, %c256] : memref<16x512xbf16, #tpu.memory_space<vmem>>, vector<16x128xbf16>
    %24 = arith.extf %23 : vector<16x128xbf16> to vector<16x128xf32>
    %c64_i32_10 = arith.constant 64 : i32
    %25 = tpu.dynamic_rotate %24 by %c64_i32_10 dim 1 : vector<16x128xf32>, i32 -> vector<16x128xf32>
    %26 = arith.mulf %24, %3 : vector<16x128xf32>
    %27 = arith.mulf %25, %6 : vector<16x128xf32>
    %28 = arith.addf %26, %27 : vector<16x128xf32>
    %29 = arith.truncf %28 : vector<16x128xf32> to vector<16x128xbf16>
    %c0_11 = arith.constant 0 : index
    %c256_12 = arith.constant 256 : index
    %30 = vector.load %arg4[%c0_11, %c256_12] : memref<16x512xbf16, #tpu.memory_space<vmem>>, vector<16x128xbf16>
    tpu.vector_store %arg4[%c0_11, %c256_12], %29 {strides = array<i32>} : memref<16x512xbf16, #tpu.memory_space<vmem>>, vector<16x128xbf16>,
    %c0_13 = arith.constant 0 : index
    %c384 = arith.constant 384 : index
    %31 = vector.load %arg2[%c0_13, %c384] : memref<16x512xbf16, #tpu.memory_space<vmem>>, vector<16x128xbf16>
    %32 = arith.extf %31 : vector<16x128xbf16> to vector<16x128xf32>
    %c64_i32_14 = arith.constant 64 : i32
    %33 = tpu.dynamic_rotate %32 by %c64_i32_14 dim 1 : vector<16x128xf32>, i32 -> vector<16x128xf32>
    %34 = arith.mulf %32, %3 : vector<16x128xf32>
    %35 = arith.mulf %33, %6 : vector<16x128xf32>
    %36 = arith.addf %34, %35 : vector<16x128xf32>
    %37 = arith.truncf %36 : vector<16x128xf32> to vector<16x128xbf16>
    %c0_15 = arith.constant 0 : index
    %c384_16 = arith.constant 384 : index
    %38 = vector.load %arg4[%c0_15, %c384_16] : memref<16x512xbf16, #tpu.memory_space<vmem>>, vector<16x128xbf16>
    tpu.vector_store %arg4[%c0_15, %c384_16], %37 {strides = array<i32>} : memref<16x512xbf16, #tpu.memory_space<vmem>>, vector<16x128xbf16>,
    %c0_17 = arith.constant 0 : index
    %c0_18 = arith.constant 0 : index
    %39 = vector.load %arg3[%c0_17, %c0_18] : memref<16x256xbf16, #tpu.memory_space<vmem>>, vector<16x128xbf16>
    %40 = arith.extf %39 : vector<16x128xbf16> to vector<16x128xf32>
    %c64_i32_19 = arith.constant 64 : i32
    %41 = tpu.dynamic_rotate %40 by %c64_i32_19 dim 1 : vector<16x128xf32>, i32 -> vector<16x128xf32>
    %42 = arith.mulf %40, %3 : vector<16x128xf32>
    %43 = arith.mulf %41, %6 : vector<16x128xf32>
    %44 = arith.addf %42, %43 : vector<16x128xf32>
    %45 = arith.truncf %44 : vector<16x128xf32> to vector<16x128xbf16>
    %c0_20 = arith.constant 0 : index
    %c0_21 = arith.constant 0 : index
    %46 = vector.load %arg5[%c0_20, %c0_21] : memref<16x256xbf16, #tpu.memory_space<vmem>>, vector<16x128xbf16>
    tpu.vector_store %arg5[%c0_20, %c0_21], %45 {strides = array<i32>} : memref<16x256xbf16, #tpu.memory_space<vmem>>, vector<16x128xbf16>,
    %c0_22 = arith.constant 0 : index
    %c128_23 = arith.constant 128 : index
    %47 = vector.load %arg3[%c0_22, %c128_23] : memref<16x256xbf16, #tpu.memory_space<vmem>>, vector<16x128xbf16>
    %48 = arith.extf %47 : vector<16x128xbf16> to vector<16x128xf32>
    %c64_i32_24 = arith.constant 64 : i32
    %49 = tpu.dynamic_rotate %48 by %c64_i32_24 dim 1 : vector<16x128xf32>, i32 -> vector<16x128xf32>
    %50 = arith.mulf %48, %3 : vector<16x128xf32>
    %51 = arith.mulf %49, %6 : vector<16x128xf32>
    %52 = arith.addf %50, %51 : vector<16x128xf32>
    %53 = arith.truncf %52 : vector<16x128xf32> to vector<16x128xbf16>
    %c0_25 = arith.constant 0 : index
    %c128_26 = arith.constant 128 : index
    %54 = vector.load %arg5[%c0_25, %c128_26] : memref<16x256xbf16, #tpu.memory_space<vmem>>, vector<16x128xbf16>
    tpu.vector_store %arg5[%c0_25, %c128_26], %53 {strides = array<i32>} : memref<16x256xbf16, #tpu.memory_space<vmem>>, vector<16x128xbf16>,
    return
  }
  func.func @transform_0(%arg0: i32) -> (i32, i32) {
    %c0_i32 = arith.constant 0 : i32
    %c0_i32_0 = arith.constant 0 : i32
    return %arg0, %c0_i32 : i32, i32
  }
  func.func @transform_1(%arg0: i32) -> (i32, i32) {
    %c0_i32 = arith.constant 0 : i32
    %c0_i32_0 = arith.constant 0 : i32
    return %arg0, %c0_i32 : i32, i32
  }
  func.func @transform_2(%arg0: i32) -> (i32, i32) {
    %c0_i32 = arith.constant 0 : i32
    %c0_i32_0 = arith.constant 0 : i32
    return %arg0, %c0_i32 : i32, i32
  }
  func.func @transform_3(%arg0: i32) -> (i32, i32) {
    %c0_i32 = arith.constant 0 : i32
    %c0_i32_0 = arith.constant 0 : i32
    return %arg0, %c0_i32 : i32, i32
  }
  func.func @transform_4(%arg0: i32) -> (i32, i32) {
    %c0_i32 = arith.constant 0 : i32
    %c0_i32_0 = arith.constant 0 : i32
    return %arg0, %c0_i32 : i32, i32
  }
}

</mosaic_0001>

<llo_original>
// kernel: tpu_custom_call.1
$region0: #{tpu_custom_call.1}
  #allocation0 [shape = 'u32[]', space=smem, size = 0x4, offset = 0x4, fixed_abs, tag = 'smem constant byte address 0x4 - core index']
  #allocation1 [shape = 'u32[144,128]{1,0:T(1,128)}', space=vmem, size = 0x12000, scoped, tag = 'internal scratch']
  %s0 = inlined_call_operand.vmem [shape: f32[12,128], index: 0, kind: input, shape index: {}]
  %s1 = inlined_call_operand.hbm [shape: bf16[12,512], index: 1, kind: input, shape index: {}, may-alias: {1,3}]
  %s2 = inlined_call_operand.hbm [shape: bf16[12,256], index: 2, kind: input, shape index: {}, may-alias: {2,4}]
  %s3 = inlined_call_operand.hbm [shape: bf16[12,512], index: 3, kind: output, shape index: {0}, may-alias: {1,3}]
  %s4 = inlined_call_operand.hbm [shape: bf16[12,256], index: 4, kind: output, shape index: {1}, may-alias: {2,4}]
  %5 = xla_tuple %s3, %s4
  %s6 = sld [smem:[#allocation0]]
  $region38: #{tpu_custom_call.1} parent=0
    _
  %s8 = ssub.s32 1, %s6
  %s9 = scalar_select 0, %s8, %s6
  $region1: #{tpu_custom_call.1} parent=0
    #allocation2 [shape = 'u8[16384]{0}', space=vmem, size = 0x4000, scoped, tag = 'input window, operand 1, single buffered']
    #allocation3 [shape = 's32[1]{0}', space=sflag, size = 0x4, scoped, tag = 'scoped memory for tpu_custom_call.1']
    #allocation4 [shape = 's32[1]{0}', space=sflag, size = 0x4, scoped, tag = 'scoped memory for tpu_custom_call.1']
    #allocation5 [shape = 'u8[8192]{0}', space=vmem, size = 0x2000, scoped, tag = 'input window, operand 2, single buffered']
    #allocation6 [shape = 's32[1]{0}', space=sflag, size = 0x4, scoped, tag = 'scoped memory for tpu_custom_call.1']
    #allocation7 [shape = 'u8[16384]{0}', space=vmem, size = 0x4000, scoped, tag = 'output window, operand 0, single buffered']
    #allocation8 [shape = 'u8[8192]{0}', space=vmem, size = 0x2000, scoped, tag = 'output window, operand 1, single buffered']
    #allocation9 [shape = 's32[1]{0}', space=sflag, size = 0x4, scoped, tag = 'scoped memory for tpu_custom_call.1']
    %10 = vsyncpa [#allocation3], 0
    %11 = vsyncpa [#allocation6], 0
    %12 = vsyncpa [#allocation4], 0
    %13 = vsyncpa [#allocation9], 0
    // Predicated region
    $region2: #{tpu_custom_call.1} parent=1 // pred_check
      _
    $region3: #{tpu_custom_call.1} parent=1 // pred_check_branch
      %15 = sbr.rel (0) target = $region5
    $region4: #{tpu_custom_call.1} parent=1 // pred_region
      _
    $region5: #{tpu_custom_call.1} parent=1 // pred_fallthru
      _
    // Predicated region
    $region6: #{tpu_custom_call.1} parent=1 // pred_check
      _
    $region7: #{tpu_custom_call.1} parent=1 // pred_check_branch
      %17 = sbr.rel (0) target = $region9
    $region8: #{tpu_custom_call.1} parent=1 // pred_region
      %s19 = ssub.s32 512, 512
      %20 = vsyncadd [#allocation3], %s19
      %s21 = sshll.u32 [#allocation2], 4
      %s22 = int_to_ptr.vmem [resolvable:$true] %s21
      %27 = dma.hbm_to_vmem [thread:$0]  %s1, 512, %s22, [#allocation3], 256, 256, 16
    $region9: #{tpu_custom_call.1} parent=1 // pred_fallthru
      _
    // Predicated region
    $region10: #{tpu_custom_call.1} parent=1 // pred_check
      _
    $region11: #{tpu_custom_call.1} parent=1 // pred_check_branch
      %29 = sbr.rel (0) target = $region13
    $region12: #{tpu_custom_call.1} parent=1 // pred_region
      %s31 = ssub.s32 256, 256
      %32 = vsyncadd [#allocation6], %s31
      %s33 = sshll.u32 [#allocation5], 4
      %s34 = int_to_ptr.vmem [resolvable:$true] %s33
      %39 = dma.hbm_to_vmem [thread:$0]  %s2, 256, %s34, [#allocation6], 128, 128, 8
    $region13: #{tpu_custom_call.1} parent=1 // pred_fallthru
      _
    // Predicated region
    $region14: #{tpu_custom_call.1} parent=1 // pred_check
      _
    $region15: #{tpu_custom_call.1} parent=1 // pred_check_branch
      %41 = sbr.rel (0) target = $region17
    $region16: #{tpu_custom_call.1} parent=1 // pred_region
      %42 = dma.done [#allocation3], 512
    $region17: #{tpu_custom_call.1} parent=1 // pred_fallthru
      _
    // Predicated region
    $region18: #{tpu_custom_call.1} parent=1 // pred_check
      _
    $region19: #{tpu_custom_call.1} parent=1 // pred_check_branch
      %44 = sbr.rel (0) target = $region21
    $region20: #{tpu_custom_call.1} parent=1 // pred_region
      %45 = dma.done [#allocation6], 256
    $region21: #{tpu_custom_call.1} parent=1 // pred_fallthru
      _
    %v46 = vld [vmem:[%s0] sm:$0xff]
    %v47 = vld [vmem:[%s0 + $0x8] sm:$0xff]
    %50 = vrot.lane.b32.xlu0 %v46, 64
    %v51 = vpop.permute.xlu0 %50
    %52 = vrot.lane.b32.xlu0 %v47, 64
    %v53 = vpop.permute.xlu0 %52
    %vm56 = vcmask 523264
    %v57 = vsel %vm56, %v46, %v51
    %v58 = vsel %vm56, %v47, %v53
    %v59 = vsub.f32 0.0, %v46
    %v60 = vsub.f32 0.0, %v47
    %63 = vrot.lane.b32.xlu0 %v59, 64
    %v64 = vpop.permute.xlu0 %63
    %65 = vrot.lane.b32.xlu0 %v60, 64
    %v66 = vpop.permute.xlu0 %65
    %v69 = vsel %vm56, %v64, %v46
    %v70 = vsel %vm56, %v66, %v47
    %v71 = vld [vmem:[#allocation2] sm:$0xf]
    %v72 = vld [vmem:[#allocation2 + $0x10] sm:$0xf]
    %v73 = vunpack.c.l.bf16 %v71
    %v74 = vunpack.c.l.bf16 %v72
    %75 = vrot.lane.b32.xlu0 %v73, 64
    %v76 = vpop.permute.xlu0 %75
    %77 = vrot.lane.b32.xlu0 %v74, 64
    %v78 = vpop.permute.xlu0 %77
    %v79 = vmul.f32 %v73, %v57
    %v80 = vmul.f32 %v74, %v58
    %v81 = vmul.f32 %v76, %v69
    %v82 = vmul.f32 %v78, %v70
    %v83 = vadd.f32 %v79, %v81
    %v84 = vadd.f32 %v80, %v82
    %v85 = vpack.c.bf16 %v84, %v83
    %v87 = vunpack.c.l.b16 %v85
    %v88 = vunpack.c.h.b16 %v85
    %v89 = vpack.c.b16 %v87, %v87
    %v90 = vpack.c.b16 %v88, %v88
    %93 = vst [vmem:[#allocation7] sm:$0xf] %v89
    %94 = vst [vmem:[#allocation7 + $0x10] sm:$0xf] %v90
    %v95 = vld [vmem:[#allocation2 + $0x4] sm:$0xf]
    %v96 = vld [vmem:[#allocation2 + $0x14] sm:$0xf]
    %v97 = vunpack.c.l.bf16 %v95
    %v98 = vunpack.c.l.bf16 %v96
    %99 = vrot.lane.b32.xlu0 %v97, 64
    %v100 = vpop.permute.xlu0 %99
    %101 = vrot.lane.b32.xlu0 %v98, 64
    %v102 = vpop.permute.xlu0 %101
    %v103 = vmul.f32 %v97, %v57
    %v104 = vmul.f32 %v98, %v58
    %v105 = vmul.f32 %v100, %v69
    %v106 = vmul.f32 %v102, %v70
    %v107 = vadd.f32 %v103, %v105
    %v108 = vadd.f32 %v104, %v106
    %v109 = vpack.c.bf16 %v108, %v107
    %v111 = vunpack.c.l.b16 %v109
    %v112 = vunpack.c.h.b16 %v109
    %v113 = vpack.c.b16 %v111, %v111
    %v114 = vpack.c.b16 %v112, %v112
    %117 = vst [vmem:[#allocation7 + $0x4] sm:$0xf] %v113
    %118 = vst [vmem:[#allocation7 + $0x14] sm:$0xf] %v114
    %v119 = vld [vmem:[#allocation2 + $0x8] sm:$0xf]
    %v120 = vld [vmem:[#allocation2 + $0x18] sm:$0xf]
    %v121 = vunpack.c.l.bf16 %v119
    %v122 = vunpack.c.l.bf16 %v120
    %123 = vrot.lane.b32.xlu0 %v121, 64
    %v124 = vpop.permute.xlu0 %123
    %125 = vrot.lane.b32.xlu0 %v122, 64
    %v126 = vpop.permute.xlu0 %125
    %v127 = vmul.f32 %v121, %v57
    %v128 = vmul.f32 %v122, %v58
    %v129 = vmul.f32 %v124, %v69
    %v130 = vmul.f32 %v126, %v70
    %v131 = vadd.f32 %v127, %v129
    %v132 = vadd.f32 %v128, %v130
    %v133 = vpack.c.bf16 %v132, %v131
    %v135 = vunpack.c.l.b16 %v133
    %v136 = vunpack.c.h.b16 %v133
    %v137 = vpack.c.b16 %v135, %v135
    %v138 = vpack.c.b16 %v136, %v136
    %141 = vst [vmem:[#allocation7 + $0x8] sm:$0xf] %v137
    %142 = vst [vmem:[#allocation7 + $0x18] sm:$0xf] %v138
    %v143 = vld [vmem:[#allocation2 + $0xc] sm:$0xf]
    %v144 = vld [vmem:[#allocation2 + $0x1c] sm:$0xf]
    %v145 = vunpack.c.l.bf16 %v143
    %v146 = vunpack.c.l.bf16 %v144
    %147 = vrot.lane.b32.xlu0 %v145, 64
    %v148 = vpop.permute.xlu0 %147
    %149 = vrot.lane.b32.xlu0 %v146, 64
    %v150 = vpop.permute.xlu0 %149
    %v151 = vmul.f32 %v145, %v57
    %v152 = vmul.f32 %v146, %v58
    %v153 = vmul.f32 %v148, %v69
    %v154 = vmul.f32 %v150, %v70
    %v155 = vadd.f32 %v151, %v153
    %v156 = vadd.f32 %v152, %v154
    %v157 = vpack.c.bf16 %v156, %v155
    %v159 = vunpack.c.l.b16 %v157
    %v160 = vunpack.c.h.b16 %v157
    %v161 = vpack.c.b16 %v159, %v159
    %v162 = vpack.c.b16 %v160, %v160
    %165 = vst [vmem:[#allocation7 + $0xc] sm:$0xf] %v161
    %166 = vst [vmem:[#allocation7 + $0x1c] sm:$0xf] %v162
    %v167 = vld [vmem:[#allocation5] sm:$0xf]
    %v168 = vld [vmem:[#allocation5 + $0x8] sm:$0xf]
    %v169 = vunpack.c.l.bf16 %v167
    %v170 = vunpack.c.l.bf16 %v168
    %171 = vrot.lane.b32.xlu0 %v169, 64
    %v172 = vpop.permute.xlu0 %171
    %173 = vrot.lane.b32.xlu0 %v170, 64
    %v174 = vpop.permute.xlu0 %173
    %v175 = vmul.f32 %v169, %v57
    %v176 = vmul.f32 %v170, %v58
    %v177 = vmul.f32 %v172, %v69
    %v178 = vmul.f32 %v174, %v70
    %v179 = vadd.f32 %v175, %v177
    %v180 = vadd.f32 %v176, %v178
    %v181 = vpack.c.bf16 %v180, %v179
    %v183 = vunpack.c.l.b16 %v181
    %v184 = vunpack.c.h.b16 %v181
    %v185 = vpack.c.b16 %v183, %v183
    %v186 = vpack.c.b16 %v184, %v184
    %189 = vst [vmem:[#allocation8] sm:$0xf] %v185
    %190 = vst [vmem:[#allocation8 + $0x8] sm:$0xf] %v186
    %v191 = vld [vmem:[#allocation5 + $0x4] sm:$0xf]
    %v192 = vld [vmem:[#allocation5 + $0xc] sm:$0xf]
    %v193 = vunpack.c.l.bf16 %v191
    %v194 = vunpack.c.l.bf16 %v192
    %195 = vrot.lane.b32.xlu0 %v193, 64
    %v196 = vpop.permute.xlu0 %195
    %197 = vrot.lane.b32.xlu0 %v194, 64
    %v198 = vpop.permute.xlu0 %197
    %v199 = vmul.f32 %v193, %v57
    %v200 = vmul.f32 %v194, %v58
    %v201 = vmul.f32 %v196, %v69
    %v202 = vmul.f32 %v198, %v70
    %v203 = vadd.f32 %v199, %v201
    %v204 = vadd.f32 %v200, %v202
    %v205 = vpack.c.bf16 %v204, %v203
    %v207 = vunpack.c.l.b16 %v205
    %v208 = vunpack.c.h.b16 %v205
    %v209 = vpack.c.b16 %v207, %v207
    %v210 = vpack.c.b16 %v208, %v208
    %213 = vst [vmem:[#allocation8 + $0x4] sm:$0xf] %v209
    %214 = vst [vmem:[#allocation8 + $0xc] sm:$0xf] %v210
    // Predicated region
    $region22: #{tpu_custom_call.1} parent=1 // pred_check
      _
    $region23: #{tpu_custom_call.1} parent=1 // pred_check_branch
      %216 = sbr.rel (0) target = $region25
    $region24: #{tpu_custom_call.1} parent=1 // pred_region
      %s218 = ssub.s32 512, 512
      %219 = vsyncadd [#allocation4], %s218
      %s220 = sshll.u32 [#allocation7], 4
      %s221 = int_to_ptr.vmem [resolvable:$true] %s220
      %226 = dma.vmem_to_hbm [thread:$0]  %s221, 512, %s3, [#allocation4], 256, 256, 16
    $region25: #{tpu_custom_call.1} parent=1 // pred_fallthru
      _
    // Predicated region
    $region26: #{tpu_custom_call.1} parent=1 // pred_check
      _
    $region27: #{tpu_custom_call.1} parent=1 // pred_check_branch
      %228 = sbr.rel (0) target = $region29
    $region28: #{tpu_custom_call.1} parent=1 // pred_region
      %s230 = ssub.s32 256, 256
      %231 = vsyncadd [#allocation9], %s230
      %s232 = sshll.u32 [#allocation8], 4
      %s233 = int_to_ptr.vmem [resolvable:$true] %s232
      %238 = dma.vmem_to_hbm [thread:$0]  %s233, 256, %s4, [#allocation9], 128, 128, 8
    $region29: #{tpu_custom_call.1} parent=1 // pred_fallthru
      _
    // Predicated region
    $region30: #{tpu_custom_call.1} parent=1 // pred_check
      _
    $region31: #{tpu_custom_call.1} parent=1 // pred_check_branch
      %240 = sbr.rel (0) target = $region33
    $region32: #{tpu_custom_call.1} parent=1 // pred_region
      %241 = dma.done [#allocation4], 512
    $region33: #{tpu_custom_call.1} parent=1 // pred_fallthru
      _
    // Predicated region
    $region34: #{tpu_custom_call.1} parent=1 // pred_check
      _
    $region35: #{tpu_custom_call.1} parent=1 // pred_check_branch
      %243 = sbr.rel (0) target = $region37
    $region36: #{tpu_custom_call.1} parent=1 // pred_region
      %244 = dma.done [#allocation9], 256
    $region37: #{tpu_custom_call.1} parent=1 // pred_fallthru
      _
    %245 = vsyncpa [#allocation3], 1
    %246 = vsyncpa [#allocation6], 1
    %247 = vsyncpa [#allocation4], 1
    %248 = vsyncpa [#allocation9], 1

</llo_original>
